<compile_context>
chip_gen: v6e
topology: v6e:2x2x1
jax: 0.10.0
libtpu: 0.0.40
codegen_flags: <defaults>
</compile_context>

<pallas_src>
import functools

import jax
import jax.numpy as jnp
from jax.experimental import pallas as pl
from jax.experimental.pallas import tpu as pltpu


def _round_up(x, m):
    return ((x + m - 1) // m) * m


# ----------------------------- Pallas kernel -------------------------------

def _actor_batch_kernel(obs_ref, w_ref, out_ref):
    """tanh(obs_aug @ W_aug) for one tile of timestep rows.

    obs_ref : (TM, K)        bf16 obs tile, ones column folded in (K = obs_dim+1)
    w_ref   : (K, DIM_PAD)   bf16 fused weight (bias folded in; VMEM-resident
                             across the whole grid via constant index_map)
    out_ref : (TM, DIM_PAD)  bf16 output tile (lane-dense, unmasked stores)
    """
    y = jnp.dot(obs_ref[...], w_ref[...], preferred_element_type=jnp.float32)
    # tanh on the f32 accumulator (portable: v5e has no bf16 EUP path);
    # cast to bf16 only at the store.
    out_ref[...] = jnp.tanh(y).astype(out_ref.dtype)


@functools.partial(jax.jit, static_argnames=("t_real", "dim", "tm"))
def actor_features_all(obs_pad, w_aug_pad, *, t_real, dim, tm):
    """All timesteps in one pallas_call; de-padded inside the same dispatch.

    obs_pad   : (T_pad, K)        bf16, T_pad a multiple of tm
    w_aug_pad : (K, DIM_PAD)      bf16, DIM_PAD a multiple of 128
    returns   : (t_real, dim)     bf16
    """
    t_pad, k = obs_pad.shape
    dim_pad = w_aug_pad.shape[1]
    grid = (t_pad // tm,)

    cost = pl.CostEstimate(
        flops=2 * t_pad * k * dim_pad,
        transcendentals=t_pad * dim_pad,
        bytes_accessed=2 * (t_pad * k + k * dim_pad + t_pad * dim_pad),  # bf16
    )

    out = pl.pallas_call(
        _actor_batch_kernel,
        out_shape=jax.ShapeDtypeStruct((t_pad, dim_pad), jnp.bfloat16),
        grid_spec=pltpu.PrefetchScalarGridSpec(
            num_scalar_prefetch=0,
            grid=grid,
            in_specs=[
                pl.BlockSpec((tm, k), lambda i: (i, 0)),
                # Constant index_map -> weight stays VMEM-resident across grid.
                pl.BlockSpec((k, dim_pad), lambda i: (0, 0)),
            ],
            out_specs=pl.BlockSpec((tm, dim_pad), lambda i: (i, 0)),
        ),
        compiler_params=pltpu.CompilerParams(
            dimension_semantics=("parallel",),   # shards row-tiles over 2 TCs on v7x
        ),
        cost_estimate=cost,
    )(obs_pad, w_aug_pad)

    # De-pad once, fused into the same jitted dispatch.
    return out[:t_real, :dim]


# --------------------------- tile-size selection ----------------------------

_ROW_ALIGN = 16                      # bf16 sublane-pack granularity
_VMEM_BUDGET_BYTES = 16 * 1024 * 1024  # well under the 32 MiB scoped default
                                       # (v7x physical VMEM is only 64 MiB)


def _pick_tile(t_rows, k, dim_pad, itemsize=2):
    """Row-tile size: big (<=512) to amortize per-step overhead, >=2 grid steps
    when the horizon allows (v7x megacore), and within the VMEM budget."""
    t_aln = _round_up(max(t_rows, 1), _ROW_ALIGN)
    tm = min(512, t_aln)
    if t_aln // tm < 2 and t_aln >= 2 * _ROW_ALIGN:
        tm = max(_ROW_ALIGN, _round_up((t_aln + 1) // 2, _ROW_ALIGN))

    def vmem_bytes(tm_):
        # double-buffered obs + out tiles, plus (double-buffered) weights
        return itemsize * (2 * tm_ * k + 2 * tm_ * dim_pad + 2 * k * dim_pad)

    while tm > _ROW_ALIGN and vmem_bytes(tm) > _VMEM_BUDGET_BYTES:
        tm = max(_ROW_ALIGN, _round_up(tm // 2, _ROW_ALIGN))
    return tm


# ------------------------- Actor wrapper (glue) -----------------------------

class SimpleEnv:
    """Tiny stand-in for the macarico env: a horizon, a timestep, observations."""

    def __init__(self, observations):
        self._obs = observations          # (T, obs_dim)
        self._t = 0

    def horizon(self):
        return self._obs.shape[0]

    def timestep(self):
        return self._t

    def observation(self):
        return self._obs[self._t:self._t + 1]   # (1, obs_dim)

    def all_observations(self):
        return self._obs                        # (T, obs_dim)

    def step(self):
        self._t += 1


class Actor:
    """JAX/Pallas port of macarico Actor: per-timestep feature caching.

    Weight fusion (concat_a(obs@W_att[a]) @ W_out == obs @ (W_cat@W_out)) plus
    bias folding is done once at construction; the whole horizon's features are
    computed in one batched Pallas call the first time forward() is hit, then
    served from the per-timestep cache exactly like the torch module.
    """

    def __init__(self, n_actions, dim, w_att, w_out, b_out):
        self.n_actions = n_actions
        self.dim = dim

        # --- algebraic fusion, done once, in f32 ---------------------------
        n_att, obs_dim, att_dim = w_att.shape
        w_cat = jnp.concatenate([w_att[a] for a in range(n_att)], axis=-1)
        w_fused = jnp.dot(w_cat.astype(jnp.float32), w_out.astype(jnp.float32),
                          preferred_element_type=jnp.float32)   # (obs_dim, dim)
        # Fold the bias in as an extra weight row (obs gets a ones column).
        w_aug = jnp.concatenate(
            [w_fused, b_out.astype(jnp.float32).reshape(1, dim)], axis=0)  # (obs_dim+1, dim)

        # Lane-dense padding of the output width to a multiple of 128.
        dim_pad = _round_up(dim, 128)
        w_aug_pad = jnp.pad(w_aug, ((0, 0), (0, dim_pad - dim)))
        # Cast to bf16 only AFTER the f32 fusion product (keeps rounding tight).
        self._w_aug_pad = w_aug_pad.astype(jnp.bfloat16)

        self._dim_pad = dim_pad
        self._obs_dim = obs_dim
        self._k = obs_dim + 1

        # TypeMemory.param (torch.zeros(1)) — unused in forward, kept for parity.
        self._typememory_param = jnp.zeros((1,), jnp.float32)

        self._features = None
        self._T = None
        self._last_t = 0

    def reset(self):
        self._last_t = 0
        self._T = None
        self._features = None

    def _compute_all(self, env):
        """One batched Pallas dispatch for every timestep; fill the cache once."""
        obs = jnp.asarray(env.all_observations(), jnp.float32)     # (T, obs_dim)
        T = obs.shape[0]
        ones = jnp.ones((T, 1), jnp.float32)
        obs_aug = jnp.concatenate([obs, ones], axis=-1).astype(jnp.bfloat16)

        tm = _pick_tile(T, self._k, self._dim_pad)
        t_pad = _round_up(max(T, 1), tm)
        obs_pad = jnp.pad(obs_aug, ((0, t_pad - T), (0, 0)))

        feats = actor_features_all(obs_pad, self._w_aug_pad,
                                   t_real=T, dim=self.dim, tm=tm)   # (T, dim) bf16
        # Split into per-timestep rows once (outside the forward() hot loop).
        self._features = list(jnp.split(feats, T, axis=0)) if T > 0 else []

    def forward(self, env):
        if self._features is None or self._T is None:
            self._T = env.horizon()
            self._last_t = 0
            self._compute_all(env)
        t = env.timestep()
        assert t <= self._last_t + 1, '%d <= %d+1' % (t, self._last_t)
        assert t >= self._last_t, '%d >= %d' % (t, self._last_t)
        self._last_t = t
        assert self._features is not None
        assert t >= 0, 'expect t>=0, bug?'
        assert t < self._T, '%d=t < T=%d' % (t, self._T)
        assert t < len(self._features)

        ft = self._features[t]              # cached (1, dim) row — no dispatch
        assert ft.ndim == 2
        assert ft.shape[0] == 1
        assert ft.shape[1] == self.dim
        return ft

    __call__ = forward


# --------------------------------- main -------------------------------------

if __name__ == "__main__":
    # Small shapes consistent with the module.
    n_actions = 4
    dim = 32           # Actor.dim
    obs_dim = 8        # env observation feature width
    n_att = 2          # len(attention)
    att_dim = 16       # per-attention feature width -> concat width = 32
    T = 3              # env horizon

    key = jax.random.PRNGKey(0)
    k1, k2, k3, k4 = jax.random.split(key, 4)
    w_att = jax.random.normal(k1, (n_att, obs_dim, att_dim), jnp.float32) * 0.1
    w_out = jax.random.normal(k2, (n_att * att_dim, dim), jnp.float32) * 0.1
    b_out = jax.random.normal(k3, (1, dim), jnp.float32) * 0.1
    observations = jax.random.normal(k4, (T, obs_dim), jnp.float32)

    actor = Actor(n_actions, dim, w_att, w_out, b_out)
    env = SimpleEnv(observations)

    outs = []
    for t in range(T):
        ft = actor(env)                 # zero device dispatches in the hot loop
        outs.append(ft)
        # calling again at the same timestep hits the cache (same object)
        assert actor(env) is ft
        if t + 1 < T:
            env.step()

    # Block once at the end.
    outs = [jax.block_until_ready(o) for o in outs]

    # Reference check against plain (unfused, f32) JAX.  bf16 streaming dtypes
    # warrant a looser tolerance.
    import numpy as np
    for t in range(T):
        obs = observations[t:t + 1]
        feats = [obs @ w_att[a] for a in range(n_att)]
        x = jnp.concatenate(feats, axis=-1)
        ref = jnp.tanh(x @ w_out + b_out)
        np.testing.assert_allclose(np.asarray(outs[t], dtype=np.float32),
                                   np.asarray(ref), rtol=2e-2, atol=2e-2)
        assert outs[t].shape == (1, dim)

    print("KERNEL_OK")
</pallas_src>

<mosaic_0001>
module attributes {stable_mosaic.version = 11 : i64} {
  func.func @_actor_batch_kernel(%arg0: i32, %arg1: memref<16x9xbf16, #tpu.memory_space<vmem>>, %arg2: memref<9x128xbf16, #tpu.memory_space<vmem>>, %arg3: memref<16x128xbf16, #tpu.memory_space<vmem>>) attributes {dimension_semantics = [#tpu.dimension_semantics<parallel>], iteration_bounds = array<i64: 1>, scalar_prefetch = 0 : i64, scratch_operands = 0 : i64, tpu.core_type = #tpu.core_type<tc>, window_params = [{transform_indices = @transform_0, window_bounds = array<i64: 16, 9>}, {pipeline_mode = #tpu.pipeline_mode<synchronous>, transform_indices = @transform_1, window_bounds = array<i64: 9, 128>}, {transform_indices = @transform_2, window_bounds = array<i64: 16, 128>}]} {
    %c0 = arith.constant 0 : index
    %c0_0 = arith.constant 0 : index
    %0 = vector.load %arg1[%c0, %c0_0] : memref<16x9xbf16, #tpu.memory_space<vmem>>, vector<16x9xbf16>
    %c0_1 = arith.constant 0 : index
    %c0_2 = arith.constant 0 : index
    %1 = vector.load %arg2[%c0_1, %c0_2] : memref<9x128xbf16, #tpu.memory_space<vmem>>, vector<9x128xbf16>
    %cst = arith.constant dense<0.000000e+00> : vector<16x128xf32>
    %2 = tpu.matmul %0, %1, %cst {dimension_numbers = #tpu.dot_dimension_numbers<[1], [0], [0], [1], [0, 0, 1, 1], [], []>} : vector<16x9xbf16>, vector<9x128xbf16>, vector<16x128xf32> -> vector<16x128xf32>
    %3 = math.tanh %2 : vector<16x128xf32>
    %4 = arith.truncf %3 : vector<16x128xf32> to vector<16x128xbf16>
    %c0_3 = arith.constant 0 : index
    %c0_4 = arith.constant 0 : index
    %5 = vector.load %arg3[%c0_3, %c0_4] : memref<16x128xbf16, #tpu.memory_space<vmem>>, vector<16x128xbf16>
    tpu.vector_store %arg3[%c0_3, %c0_4], %4 {strides = array<i32>} : memref<16x128xbf16, #tpu.memory_space<vmem>>, vector<16x128xbf16>,
    return
  }
  func.func @transform_0(%arg0: i32) -> (i32, i32) {
    %c0_i32 = arith.constant 0 : i32
    %c0_i32_0 = arith.constant 0 : i32
    return %arg0, %c0_i32 : i32, i32
  }
  func.func @transform_1(%arg0: i32) -> (i32, i32) {
    %c0_i32 = arith.constant 0 : i32
    %c0_i32_0 = arith.constant 0 : i32
    %c0_i32_1 = arith.constant 0 : i32
    return %c0_i32, %c0_i32_0 : i32, i32
  }
  func.func @transform_2(%arg0: i32) -> (i32, i32) {
    %c0_i32 = arith.constant 0 : i32
    %c0_i32_0 = arith.constant 0 : i32
    return %arg0, %c0_i32 : i32, i32
  }
}

</mosaic_0001>

<llo_original>
// kernel: actor_features_all.1
$region0: #{actor_features_all.1}
  #allocation0 [shape = 'u32[]', space=smem, size = 0x4, offset = 0x4, fixed_abs, tag = 'smem constant byte address 0x4 - core index']
  #allocation1 [shape = 'u32[144,128]{1,0:T(1,128)}', space=vmem, size = 0x12000, scoped, tag = 'internal scratch']
  %s0 = inlined_call_operand.hbm [shape: bf16[16,9], index: 0, kind: input, shape index: {}]
  %s1 = inlined_call_operand.hbm [shape: bf16[9,128], index: 1, kind: input, shape index: {}]
  %s2 = inlined_call_operand.vmem [shape: bf16[16,128], index: 2, kind: output, shape index: {}]
  %s3 = sld [smem:[#allocation0]]
  $region26: #{actor_features_all.1} parent=0
    _
  %s5 = ssub.s32 1, %s3
  %s6 = scalar_select 0, %s5, %s3
  $region1: #{actor_features_all.1} parent=0
    #allocation2 [shape = 'u8[4096]{0}', space=vmem, size = 0x1000, scoped, tag = 'input window, operand 0, single buffered']
    #allocation3 [shape = 's32[1]{0}', space=sflag, size = 0x4, scoped, tag = 'scoped memory for actor_features_all.1']
    #allocation4 [shape = 'u8[4096]{0}', space=vmem, size = 0x1000, scoped, tag = 'input window, operand 1, single buffered']
    #allocation5 [shape = 's32[1]{0}', space=sflag, size = 0x4, scoped, tag = 'scoped memory for actor_features_all.1']
    %7 = vsyncpa [#allocation3], 0
    %8 = vsyncpa [#allocation5], 0
    // Predicated region
    $region2: #{actor_features_all.1} parent=1 // pred_check
      _
    $region3: #{actor_features_all.1} parent=1 // pred_check_branch
      %10 = sbr.rel (0) target = $region5
    $region4: #{actor_features_all.1} parent=1 // pred_region
      %s12 = ssub.s32 128, 128
      %13 = vsyncadd [#allocation3], %s12
      %s14 = sshll.u32 [#allocation2], 4
      %s15 = int_to_ptr.vmem [resolvable:$true] %s14
      %20 = dma.hbm_to_vmem [thread:$0]  %s0, 128, %s15, [#allocation3], 64, 64, 4
    $region5: #{actor_features_all.1} parent=1 // pred_fallthru
      _
    // Predicated region
    $region6: #{actor_features_all.1} parent=1 // pred_check
      _
    $region7: #{actor_features_all.1} parent=1 // pred_check_branch
      %22 = sbr.rel (0) target = $region9
    $region8: #{actor_features_all.1} parent=1 // pred_region
      %s24 = ssub.s32 128, 128
      %25 = vsyncadd [#allocation5], %s24
      %s26 = sshll.u32 [#allocation4], 4
      %s27 = int_to_ptr.vmem [resolvable:$true] %s26
      %32 = dma.hbm_to_vmem [thread:$0]  %s1, 128, %s27, [#allocation5], 64, 64, 4
    $region9: #{actor_features_all.1} parent=1 // pred_fallthru
      _
    // Predicated region
    $region10: #{actor_features_all.1} parent=1 // pred_check
      _
    $region11: #{actor_features_all.1} parent=1 // pred_check_branch
      %34 = sbr.rel (0) target = $region13
    $region12: #{actor_features_all.1} parent=1 // pred_region
      %35 = dma.done [#allocation3], 128
    $region13: #{actor_features_all.1} parent=1 // pred_fallthru
      _
    // Predicated region
    $region14: #{actor_features_all.1} parent=1 // pred_check
      _
    $region15: #{actor_features_all.1} parent=1 // pred_check_branch
      %37 = sbr.rel (0) target = $region17
    $region16: #{actor_features_all.1} parent=1 // pred_region
      %38 = dma.done [#allocation5], 128
    $region17: #{actor_features_all.1} parent=1 // pred_fallthru
      _
    %v40 = vld [vmem:[#allocation2] sm:$0xf]
    %v41 = vld [vmem:[#allocation2 + $0x4] sm:$0xf]
    %v42 = vld [vmem:[#allocation4] sm:$0xf]
    %v43 = vld [vmem:[#allocation4 + $0x4] sm:$0x1]
    %v46 = vunpack.c.l.b16 %v40
    %v47 = vunpack.c.l.b16 %v41
    %v48 = vpack.c.b16 %v47, %v46
    %v51 = vunpack.c.l.b16 %v42
    %v52 = vunpack.c.l.b16 %v43
    %v53 = vpack.c.b16 %v52, %v51
    %vm54 = vcmask 72704
    %v56 = vsel %vm54, %v48, 0
    %vm58 = vcmask 1043456
    %vm59 = vcmask 1044480
    %v60 = vsel %vm58, 4294967295, 65535
    %v61 = vsel %vm59, %v60, 0
    %v63 = vand.u32 %v53, %v61
    %65 = vmatprep.subr.bf16.mxu0 0
    %66 = vmatpush1.bf16.msra.mxu0 0
    %67 = vmatprep.subr.bf16.mxu0 0
    %68 = vmatpush1.bf16.msra.mxu0 0
    %69 = vmatprep.subr.bf16.mxu0 0
    %70 = vmatpush1.bf16.msra.mxu0 0
    %71 = vmatprep.subr.bf16.mxu0 0
    %72 = vmatpush1.bf16.msra.mxu0 0
    %73 = vmatprep.subr.bf16.mxu0 0
    %74 = vmatpush1.bf16.msra.mxu0 0
    %75 = vmatprep.subr.bf16.mxu0 0
    %76 = vmatpush1.bf16.msra.mxu0 0
    %77 = vmatprep.subr.bf16.mxu0 0
    %78 = vmatpush1.bf16.msra.mxu0 0
    %79 = vmatprep.subr.bf16.mxu0 0
    %80 = vmatpush1.bf16.msra.mxu0 %v63
    %81 = vmatprep.subr.bf16.mxu0 0
    %82 = vmatpush2.bf16.msra.mxu0 0
    %83 = vmatprep.subr.bf16.mxu0 0
    %84 = vmatpush2.bf16.msra.mxu0 0
    %85 = vmatprep.subr.bf16.mxu0 0
    %86 = vmatpush2.bf16.msra.mxu0 0
    %87 = vmatprep.subr.bf16.mxu0 0
    %88 = vmatpush2.bf16.msra.mxu0 0
    %89 = vmatprep.subr.bf16.mxu0 0
    %90 = vmatpush2.bf16.msra.mxu0 0
    %91 = vmatprep.subr.bf16.mxu0 0
    %92 = vmatpush2.bf16.msra.mxu0 0
    %93 = vmatprep.subr.bf16.mxu0 0
    %94 = vmatpush2.bf16.msra.mxu0 0
    %95 = vmatprep.subr.bf16.mxu0 0
    %96 = vmatpush2.bf16.msra.mxu0 0
    %97 = vmatprep.mubr.bf16.mxu0 0
    %98 = vmatmul.mubr.bf16.gmra.mxu0 %v56
    %v99 = vpop.f32.mrf.mxu0
    %v100 = vadd.f32 0.0, %v99
    %v101 = vpop.f32.mrf.mxu0
    %v102 = vpop.f32.mrf.mxu0
    %v103 = vadd.f32 0.0, %v102
    %v104 = vpop.f32.mrf.mxu0
    %105 = vdwg.mxu0
    %v106 = vtanh.pop %v100
    %v107 = vtanh.pop %v103
    %v108 = vpack.c.bf16 %v107, %v106
    %v110 = vunpack.c.l.b16 %v108
    %v111 = vunpack.c.h.b16 %v108
    %v112 = vpack.c.b16 %v110, %v110
    %v113 = vpack.c.b16 %v111, %v111
    %116 = vst [vmem:[%s2] sm:$0xf] %v112
    %117 = vst [vmem:[%s2 + $0x4] sm:$0xf] %v113
    // Predicated region
    $region18: #{actor_features_all.1} parent=1 // pred_check
      _
    $region19: #{actor_features_all.1} parent=1 // pred_check_branch
      %119 = sbr.rel (0) target = $region21
    $region20: #{actor_features_all.1} parent=1 // pred_region
      _
    $region21: #{actor_features_all.1} parent=1 // pred_fallthru
      _
    // Predicated region
    $region22: #{actor_features_all.1} parent=1 // pred_check
      _
    $region23: #{actor_features_all.1} parent=1 // pred_check_branch
      %121 = sbr.rel (0) target = $region25
    $region24: #{actor_features_all.1} parent=1 // pred_region
      _
    $region25: #{actor_features_all.1} parent=1 // pred_fallthru
      _
    %122 = vsyncpa [#allocation3], 1
    %123 = vsyncpa [#allocation5], 1

</llo_original>
